<compile_context>
chip_gen: v7x
topology: tpu7x:2x2x1
jax: 0.10.0
libtpu: 0.0.40
codegen_flags: <defaults>
</compile_context>

<pallas_src>
import functools

import jax
import jax.numpy as jnp
from jax.experimental import pallas as pl
from jax.experimental.pallas import tpu as pltpu


# ----------------------------------------------------------------------------
# Kernel
# ----------------------------------------------------------------------------
def graphrec_kernel(xu_ref, xv_ref, w_ref, b_ref, out_ref, *, d):
    """Fused GraphRec MLP head, feature-major (batch in the lane dimension).

    xu_ref  : (D, TB)  bf16   user-tower embeddings (batch tile, lane dense)
    xv_ref  : (D, TB)  bf16   item-tower embeddings (batch tile, lane dense)
    w_ref   : (8D, D)  bf16   packed weight slab [w1u,w1v,w2u,w2v,w3u,w3v,w4p,w5p] (BN folded)
    b_ref   : (D, 8)   f32    packed bias columns [b1u,b1v,b2u,b2v,b3,b4p,b5p,0]
    out_ref : (1, TB)  f32    scores, lane dense
    """
    f32 = jnp.float32
    bf16 = jnp.bfloat16

    def w(k):                     # (D, D) weight block k (static slice -> free)
        return w_ref[k * d:(k + 1) * d, :]

    def b(k):                     # (D, 1) f32 bias column k (static slice -> free)
        return b_ref[:, k:k + 1]

    def dot(wk, x):               # bf16 x bf16 -> f32 accumulation on the MXU
        return jnp.dot(wk, x, preferred_element_type=f32)

    xu = xu_ref[...]
    xv = xv_ref[...]

    # layer 1: w_ur1 / w_vr1 with BN1 / BN2 folded, ReLU (dropout = identity in eval)
    h1u = jnp.maximum(dot(w(0), xu) + b(0), 0.0).astype(bf16)
    h1v = jnp.maximum(dot(w(1), xv) + b(1), 0.0).astype(bf16)
    # layer 2: w_ur2 / w_vr2 (no activation)
    h2u = (dot(w(2), h1u) + b(2)).astype(bf16)
    h2v = (dot(w(3), h1v) + b(3)).astype(bf16)
    # layer 3: w_uv1 on the (virtual) concat -> split into two dots, BN3 folded, ReLU
    h3 = jnp.maximum(dot(w(4), h2u) + dot(w(5), h2v) + b(4), 0.0).astype(bf16)
    # layer 4: w_uv2 (16 real rows, zero padded to D), BN4 folded, ReLU -> padded rows stay 0
    h4 = jnp.maximum(dot(w(6), h3) + b(5), 0.0).astype(bf16)
    # layer 5: w_uv3 -> one score per batch column; only an 8-row slice of w5p is pushed.
    s = dot(w_ref[7 * d:7 * d + 8, :], h4)          # (8, TB), row 0 valid
    out_ref[...] = s[0:1, :] + b_ref[0:1, 6:7]      # lane-dense store


# ----------------------------------------------------------------------------
# Wrapper
# ----------------------------------------------------------------------------
def _round_up(x, m):
    return ((x + m - 1) // m) * m


def graphrec_forward(embeds_u_fm, embeds_v_fm, packed, *, block_b=None,
                     input_buffer_count=None):
    """embeds_u_fm / embeds_v_fm: feature-major (D, B) arrays (bf16 preferred).
    Returns (B,) float32 scores."""
    D, B = embeds_u_fm.shape
    assert embeds_v_fm.shape == (D, B)
    assert D >= 16, "embed_dim must be >= 16 (w_uv2 output width)"
    w_slab, b_slab = packed["w_slab"], packed["b_slab"]
    assert w_slab.shape == (8 * D, D) and b_slab.shape == (D, 8)

    # Pad the batch only to a multiple of 128 (lane width); never to a multiple of block_b.
    b_pad = _round_up(max(B, 1), 128)

    # Batch tile: up to 2048 lanes (amortises the ~0.35us per-step overhead), capped so the
    # grid keeps >=4 tiles where possible (v7x megacore sharding of the batch axis).
    if block_b is None:
        block_b = min(2048, max(128, _round_up(-(-b_pad // 4), 128)))
    block_b = _round_up(block_b, 128)

    # bf16 for DMA + MXU (no-op if the producer already emits bf16).
    xu = embeds_u_fm.astype(jnp.bfloat16)
    xv = embeds_v_fm.astype(jnp.bfloat16)
    if b_pad != B:  # <=127 columns of pad; only hit when B is not a multiple of 128
        xu = jnp.pad(xu, ((0, 0), (0, b_pad - B)))
        xv = jnp.pad(xv, ((0, 0), (0, b_pad - B)))

    def tile_spec():
        kwargs = {}
        if input_buffer_count is not None:  # deepen input pipelining if DMA is exposed
            kwargs["pipeline_mode"] = pl.Buffered(input_buffer_count)
        return pl.BlockSpec((D, block_b), lambda i: (0, i), **kwargs)

    grid = (pl.cdiv(b_pad, block_b),)  # ragged last tile handled by Pallas (clipped stores)
    out = pl.pallas_call(
        functools.partial(graphrec_kernel, d=D),
        out_shape=jax.ShapeDtypeStruct((1, b_pad), jnp.float32),
        grid=grid,
        in_specs=[
            tile_spec(),                                  # user embeddings, pipelined
            tile_spec(),                                  # item embeddings, pipelined
            pl.BlockSpec((8 * D, D), lambda i: (0, 0)),   # weight slab, VMEM resident
            pl.BlockSpec((D, 8), lambda i: (0, 0)),       # bias slab, VMEM resident
        ],
        out_specs=pl.BlockSpec((1, block_b), lambda i: (0, i)),  # lane-dense scores
        compiler_params=pltpu.CompilerParams(
            dimension_semantics=("parallel",),            # shard batch tiles across TCs (v7x)
            vmem_limit_bytes=32 * 1024 * 1024,
        ),
    )(xu, xv, w_slab, b_slab)
    return out[0, :B]


# ----------------------------------------------------------------------------
# Parameter construction / packing
# ----------------------------------------------------------------------------
def make_raw_params(key, embed_dim):
    """Deterministic synthetic parameters matching GraphRec.__init__ shapes.

    Linear weights are stored as (in, out) = PyTorch weight (out, in) transposed.
    BatchNorms are represented by their eval-mode affine: scale, shift.
    """
    D = embed_dim
    ks = jax.random.split(key, 18)

    def lin(kw, kb, din, dout):
        w = jax.random.normal(kw, (din, dout), jnp.float32) * 0.1
        b = jax.random.normal(kb, (1, dout), jnp.float32) * 0.1
        return w, b

    w_ur1, b_ur1 = lin(ks[0], ks[1], D, D)
    w_ur2, b_ur2 = lin(ks[2], ks[3], D, D)
    w_vr1, b_vr1 = lin(ks[4], ks[5], D, D)
    w_vr2, b_vr2 = lin(ks[6], ks[7], D, D)
    w_uv1, b_uv1 = lin(ks[8], ks[9], 2 * D, D)
    w_uv2, b_uv2 = lin(ks[10], ks[11], D, 16)
    w_uv3, b_uv3 = lin(ks[12], ks[13], 16, 1)

    eps = 1e-5

    def bn(k, feat):
        k1, k2, k3, k4 = jax.random.split(k, 4)
        gamma = 1.0 + 0.1 * jax.random.normal(k1, (1, feat), jnp.float32)
        beta = 0.1 * jax.random.normal(k2, (1, feat), jnp.float32)
        r_mean = 0.1 * jax.random.normal(k3, (1, feat), jnp.float32)
        r_var = jnp.abs(1.0 + 0.1 * jax.random.normal(k4, (1, feat), jnp.float32))
        scale = gamma / jnp.sqrt(r_var + eps)      # eval-mode BN:  y = x*scale + shift
        shift = beta - r_mean * scale
        return scale, shift

    bn1_s, bn1_b = bn(ks[14], D)
    bn2_s, bn2_b = bn(ks[15], D)
    bn3_s, bn3_b = bn(ks[16], D)
    bn4_s, bn4_b = bn(ks[17], 16)

    return dict(
        w_ur1=w_ur1, b_ur1=b_ur1, w_ur2=w_ur2, b_ur2=b_ur2,
        w_vr1=w_vr1, b_vr1=b_vr1, w_vr2=w_vr2, b_vr2=b_vr2,
        w_uv1=w_uv1, b_uv1=b_uv1, w_uv2=w_uv2, b_uv2=b_uv2,
        w_uv3=w_uv3, b_uv3=b_uv3,
        bn1_s=bn1_s, bn1_b=bn1_b, bn2_s=bn2_s, bn2_b=bn2_b,
        bn3_s=bn3_s, bn3_b=bn3_b, bn4_s=bn4_s, bn4_b=bn4_b,
    )


def pack_params(p, D):
    """Fold eval-mode BN into the preceding Linears, transpose to column-major (out, in),
    split w_uv1 into its u/v halves, zero-pad w_uv2/w_uv3 to D, pack into two slabs:
       w_slab (8D, D) bf16 : [w1u, w1v, w2u, w2v, w3u, w3v, w4p, w5p]
       b_slab (D, 8)  f32  : [b1u, b1v, b2u, b2v, b3, b4p, b5p, 0]
    """
    assert D >= 16
    f32 = jnp.float32

    def colmajor(w, bias, scale=None, shift=None):
        wt = w.T.astype(f32)                       # (out, in)
        bc = bias.reshape(-1, 1).astype(f32)       # (out, 1)
        if scale is not None:
            s = scale.reshape(-1, 1)
            wt = wt * s                            # scale rows == scale outputs
            bc = bc * s + shift.reshape(-1, 1)
        return wt, bc

    w1u, b1u = colmajor(p["w_ur1"], p["b_ur1"], p["bn1_s"], p["bn1_b"])   # (D, D)
    w1v, b1v = colmajor(p["w_vr1"], p["b_vr1"], p["bn2_s"], p["bn2_b"])
    w2u, b2u = colmajor(p["w_ur2"], p["b_ur2"])
    w2v, b2v = colmajor(p["w_vr2"], p["b_vr2"])
    w3, b3 = colmajor(p["w_uv1"], p["b_uv1"], p["bn3_s"], p["bn3_b"])     # (D, 2D)
    w3u, w3v = w3[:, :D], w3[:, D:]
    w4, b4 = colmajor(p["w_uv2"], p["b_uv2"], p["bn4_s"], p["bn4_b"])     # (16, D)
    w5, b5 = colmajor(p["w_uv3"], p["b_uv3"])                             # (1, 16)

    def pad_w(w):
        out = jnp.zeros((D, D), f32)
        return out.at[:w.shape[0], :w.shape[1]].set(w)

    def pad_b(bc):
        out = jnp.zeros((D, 1), f32)
        return out.at[:bc.shape[0], :].set(bc)

    w_slab = jnp.concatenate(
        [w1u, w1v, w2u, w2v, w3u, w3v, pad_w(w4), pad_w(w5)], axis=0
    ).astype(jnp.bfloat16)                                                 # (8D, D)
    b_slab = jnp.concatenate(
        [b1u, b1v, b2u, b2v, b3, pad_b(b4), pad_b(b5), jnp.zeros((D, 1), f32)],
        axis=1)                                                            # (D, 8)

    return dict(w_slab=w_slab, b_slab=b_slab)


# ----------------------------------------------------------------------------
# Pure-JAX references
# ----------------------------------------------------------------------------
def reference_unfused(eu, ev, p):
    """Faithful GraphRec.forward in eval mode (batch-major f32, dropout = identity)."""
    relu = lambda t: jnp.maximum(t, 0.0)
    xu = relu((eu @ p["w_ur1"] + p["b_ur1"]) * p["bn1_s"] + p["bn1_b"]) @ p["w_ur2"] + p["b_ur2"]
    xv = relu((ev @ p["w_vr1"] + p["b_vr1"]) * p["bn2_s"] + p["bn2_b"]) @ p["w_vr2"] + p["b_vr2"]
    xuv = jnp.concatenate([xu, xv], axis=1)
    h = relu((xuv @ p["w_uv1"] + p["b_uv1"]) * p["bn3_s"] + p["bn3_b"])
    h = relu((h @ p["w_uv2"] + p["b_uv2"]) * p["bn4_s"] + p["bn4_b"])
    return (h @ p["w_uv3"] + p["b_uv3"])[:, 0]


def reference_folded(xu, xv, packed, D):
    """Exactly the kernel math (bf16 inputs/weights, f32 accumulation), in plain XLA."""
    w_slab, b_slab = packed["w_slab"], packed["b_slab"]
    bf16 = jnp.bfloat16
    W = lambda k: w_slab[k * D:(k + 1) * D, :]
    b = lambda k: b_slab[:, k:k + 1]
    dot = lambda w, x: jnp.dot(w, x, preferred_element_type=jnp.float32)
    xu = xu.astype(bf16)
    xv = xv.astype(bf16)
    h1u = jnp.maximum(dot(W(0), xu) + b(0), 0.0).astype(bf16)
    h1v = jnp.maximum(dot(W(1), xv) + b(1), 0.0).astype(bf16)
    h2u = (dot(W(2), h1u) + b(2)).astype(bf16)
    h2v = (dot(W(3), h1v) + b(3)).astype(bf16)
    h3 = jnp.maximum(dot(W(4), h2u) + dot(W(5), h2v) + b(4), 0.0).astype(bf16)
    h4 = jnp.maximum(dot(W(6), h3) + b(5), 0.0).astype(bf16)
    s = dot(w_slab[7 * D:7 * D + 8, :], h4)[0:1, :] + b_slab[0:1, 6:7]
    return s[0, :]


# ----------------------------------------------------------------------------
# Demo / correctness check
# ----------------------------------------------------------------------------
if __name__ == "__main__":
    key = jax.random.PRNGKey(0)
    B = 8            # batch of (user, item) pairs
    D = 32           # embed_dim
    N_USERS, N_ITEMS = 64, 64

    k_eu, k_ev, k_nu, k_nv, k_p = jax.random.split(key, 5)

    # TODO(synk): enc_u / enc_v_history (graph aggregation encoders) are replaced by
    # deterministic embedding-table lookups; the producer emits feature-major bf16
    # directly so the kernel wrapper performs no transpose/concat/pad materialization.
    embed_u_table = jax.random.normal(k_eu, (D, N_USERS), jnp.float32).astype(jnp.bfloat16)
    embed_v_table = jax.random.normal(k_ev, (D, N_ITEMS), jnp.float32).astype(jnp.bfloat16)
    nodes_u = jax.random.randint(k_nu, (B,), 0, N_USERS)
    nodes_v = jax.random.randint(k_nv, (B,), 0, N_ITEMS)
    embeds_u = embed_u_table[:, nodes_u]     # (D, B) bf16, feature-major
    embeds_v = embed_v_table[:, nodes_v]     # (D, B) bf16, feature-major

    raw = make_raw_params(k_p, D)
    packed = pack_params(raw, D)

    scores = graphrec_forward(embeds_u, embeds_v, packed)
    jax.block_until_ready(scores)
    assert scores.shape == (B,)

    # Check 1: kernel matches the identical folded bf16/f32 math in plain XLA.
    ref_fold = reference_folded(embeds_u, embeds_v, packed, D)
    assert jnp.allclose(scores, ref_fold, atol=2e-3, rtol=2e-3), \
        float(jnp.max(jnp.abs(scores - ref_fold)))

    # Check 2: the BN-fold / tower-split / bf16 rewrite matches the faithful unfused
    # f32 GraphRec forward (tolerance accounts for the bf16 weight/activation casts).
    eu_f32 = embeds_u.astype(jnp.float32).T    # back to batch-major f32 for the reference
    ev_f32 = embeds_v.astype(jnp.float32).T
    with jax.default_matmul_precision("float32"):
        ref_unfused_hp = reference_unfused(eu_f32, ev_f32, raw)
    assert jnp.allclose(ref_fold, ref_unfused_hp, atol=5e-2, rtol=5e-2), \
        float(jnp.max(jnp.abs(ref_fold - ref_unfused_hp)))

    print("KERNEL_OK")
</pallas_src>

<mosaic_0001>
module attributes {stable_mosaic.version = 11 : i64} {
  func.func @graphrec_kernel(%arg0: i32, %arg1: memref<32x128xbf16, #tpu.memory_space<vmem>>, %arg2: memref<32x128xbf16, #tpu.memory_space<vmem>>, %arg3: memref<256x32xbf16, #tpu.memory_space<vmem>>, %arg4: memref<32x8xf32, #tpu.memory_space<vmem>>, %arg5: memref<1x128xf32, #tpu.memory_space<vmem>>) attributes {dimension_semantics = [#tpu.dimension_semantics<parallel>], iteration_bounds = array<i64: 1>, scalar_prefetch = 0 : i64, scratch_operands = 0 : i64, tpu.core_type = #tpu.core_type<tc>, window_params = [{transform_indices = @transform_0, window_bounds = array<i64: 32, 128>}, {transform_indices = @transform_1, window_bounds = array<i64: 32, 128>}, {pipeline_mode = #tpu.pipeline_mode<synchronous>, transform_indices = @transform_2, window_bounds = array<i64: 256, 32>}, {pipeline_mode = #tpu.pipeline_mode<synchronous>, transform_indices = @transform_3, window_bounds = array<i64: 32, 8>}, {transform_indices = @transform_4, window_bounds = array<i64: 1, 128>}]} {
    %c0 = arith.constant 0 : index
    %c0_0 = arith.constant 0 : index
    %0 = vector.load %arg1[%c0, %c0_0] : memref<32x128xbf16, #tpu.memory_space<vmem>>, vector<32x128xbf16>
    %c0_1 = arith.constant 0 : index
    %c0_2 = arith.constant 0 : index
    %1 = vector.load %arg2[%c0_1, %c0_2] : memref<32x128xbf16, #tpu.memory_space<vmem>>, vector<32x128xbf16>
    %c0_3 = arith.constant 0 : index
    %c0_4 = arith.constant 0 : index
    %2 = vector.load %arg3[%c0_3, %c0_4] : memref<256x32xbf16, #tpu.memory_space<vmem>>, vector<32x32xbf16>
    %cst = arith.constant dense<0.000000e+00> : vector<32x128xf32>
    %3 = tpu.matmul %2, %0, %cst {dimension_numbers = #tpu.dot_dimension_numbers<[1], [0], [0], [1], [0, 0, 1, 1], [], []>} : vector<32x32xbf16>, vector<32x128xbf16>, vector<32x128xf32> -> vector<32x128xf32>
    %c0_5 = arith.constant 0 : index
    %c0_6 = arith.constant 0 : index
    %4 = vector.load %arg4[%c0_5, %c0_6] : memref<32x8xf32, #tpu.memory_space<vmem>>, vector<32x1xf32>
    %5 = vector.broadcast %4 : vector<32x1xf32> to vector<32x128xf32>
    %6 = arith.addf %3, %5 : vector<32x128xf32>
    %cst_7 = arith.constant 0.000000e+00 : f32
    %7 = vector.broadcast %cst_7 : f32 to vector<32x128xf32>
    %8 = arith.maximumf %6, %7 : vector<32x128xf32>
    %9 = arith.truncf %8 : vector<32x128xf32> to vector<32x128xbf16>
    %c32 = arith.constant 32 : index
    %c0_8 = arith.constant 0 : index
    %10 = vector.load %arg3[%c32, %c0_8] : memref<256x32xbf16, #tpu.memory_space<vmem>>, vector<32x32xbf16>
    %cst_9 = arith.constant dense<0.000000e+00> : vector<32x128xf32>
    %11 = tpu.matmul %10, %1, %cst_9 {dimension_numbers = #tpu.dot_dimension_numbers<[1], [0], [0], [1], [0, 0, 1, 1], [], []>} : vector<32x32xbf16>, vector<32x128xbf16>, vector<32x128xf32> -> vector<32x128xf32>
    %c0_10 = arith.constant 0 : index
    %c1 = arith.constant 1 : index
    %12 = vector.load %arg4[%c0_10, %c1] : memref<32x8xf32, #tpu.memory_space<vmem>>, vector<32x1xf32>
    %13 = vector.broadcast %12 : vector<32x1xf32> to vector<32x128xf32>
    %14 = arith.addf %11, %13 : vector<32x128xf32>
    %cst_11 = arith.constant 0.000000e+00 : f32
    %15 = vector.broadcast %cst_11 : f32 to vector<32x128xf32>
    %16 = arith.maximumf %14, %15 : vector<32x128xf32>
    %17 = arith.truncf %16 : vector<32x128xf32> to vector<32x128xbf16>
    %c64 = arith.constant 64 : index
    %c0_12 = arith.constant 0 : index
    %18 = vector.load %arg3[%c64, %c0_12] : memref<256x32xbf16, #tpu.memory_space<vmem>>, vector<32x32xbf16>
    %cst_13 = arith.constant dense<0.000000e+00> : vector<32x128xf32>
    %19 = tpu.matmul %18, %9, %cst_13 {dimension_numbers = #tpu.dot_dimension_numbers<[1], [0], [0], [1], [0, 0, 1, 1], [], []>} : vector<32x32xbf16>, vector<32x128xbf16>, vector<32x128xf32> -> vector<32x128xf32>
    %c0_14 = arith.constant 0 : index
    %c2 = arith.constant 2 : index
    %20 = vector.load %arg4[%c0_14, %c2] : memref<32x8xf32, #tpu.memory_space<vmem>>, vector<32x1xf32>
    %21 = vector.broadcast %20 : vector<32x1xf32> to vector<32x128xf32>
    %22 = arith.addf %19, %21 : vector<32x128xf32>
    %23 = arith.truncf %22 : vector<32x128xf32> to vector<32x128xbf16>
    %c96 = arith.constant 96 : index
    %c0_15 = arith.constant 0 : index
    %24 = vector.load %arg3[%c96, %c0_15] : memref<256x32xbf16, #tpu.memory_space<vmem>>, vector<32x32xbf16>
    %cst_16 = arith.constant dense<0.000000e+00> : vector<32x128xf32>
    %25 = tpu.matmul %24, %17, %cst_16 {dimension_numbers = #tpu.dot_dimension_numbers<[1], [0], [0], [1], [0, 0, 1, 1], [], []>} : vector<32x32xbf16>, vector<32x128xbf16>, vector<32x128xf32> -> vector<32x128xf32>
    %c0_17 = arith.constant 0 : index
    %c3 = arith.constant 3 : index
    %26 = vector.load %arg4[%c0_17, %c3] : memref<32x8xf32, #tpu.memory_space<vmem>>, vector<32x1xf32>
    %27 = vector.broadcast %26 : vector<32x1xf32> to vector<32x128xf32>
    %28 = arith.addf %25, %27 : vector<32x128xf32>
    %29 = arith.truncf %28 : vector<32x128xf32> to vector<32x128xbf16>
    %c128 = arith.constant 128 : index
    %c0_18 = arith.constant 0 : index
    %30 = vector.load %arg3[%c128, %c0_18] : memref<256x32xbf16, #tpu.memory_space<vmem>>, vector<32x32xbf16>
    %cst_19 = arith.constant dense<0.000000e+00> : vector<32x128xf32>
    %31 = tpu.matmul %30, %23, %cst_19 {dimension_numbers = #tpu.dot_dimension_numbers<[1], [0], [0], [1], [0, 0, 1, 1], [], []>} : vector<32x32xbf16>, vector<32x128xbf16>, vector<32x128xf32> -> vector<32x128xf32>
    %c160 = arith.constant 160 : index
    %c0_20 = arith.constant 0 : index
    %32 = vector.load %arg3[%c160, %c0_20] : memref<256x32xbf16, #tpu.memory_space<vmem>>, vector<32x32xbf16>
    %cst_21 = arith.constant dense<0.000000e+00> : vector<32x128xf32>
    %33 = tpu.matmul %32, %29, %cst_21 {dimension_numbers = #tpu.dot_dimension_numbers<[1], [0], [0], [1], [0, 0, 1, 1], [], []>} : vector<32x32xbf16>, vector<32x128xbf16>, vector<32x128xf32> -> vector<32x128xf32>
    %34 = arith.addf %31, %33 : vector<32x128xf32>
    %c0_22 = arith.constant 0 : index
    %c4 = arith.constant 4 : index
    %35 = vector.load %arg4[%c0_22, %c4] : memref<32x8xf32, #tpu.memory_space<vmem>>, vector<32x1xf32>
    %36 = vector.broadcast %35 : vector<32x1xf32> to vector<32x128xf32>
    %37 = arith.addf %34, %36 : vector<32x128xf32>
    %cst_23 = arith.constant 0.000000e+00 : f32
    %38 = vector.broadcast %cst_23 : f32 to vector<32x128xf32>
    %39 = arith.maximumf %37, %38 : vector<32x128xf32>
    %40 = arith.truncf %39 : vector<32x128xf32> to vector<32x128xbf16>
    %c192 = arith.constant 192 : index
    %c0_24 = arith.constant 0 : index
    %41 = vector.load %arg3[%c192, %c0_24] : memref<256x32xbf16, #tpu.memory_space<vmem>>, vector<32x32xbf16>
    %cst_25 = arith.constant dense<0.000000e+00> : vector<32x128xf32>
    %42 = tpu.matmul %41, %40, %cst_25 {dimension_numbers = #tpu.dot_dimension_numbers<[1], [0], [0], [1], [0, 0, 1, 1], [], []>} : vector<32x32xbf16>, vector<32x128xbf16>, vector<32x128xf32> -> vector<32x128xf32>
    %c0_26 = arith.constant 0 : index
    %c5 = arith.constant 5 : index
    %43 = vector.load %arg4[%c0_26, %c5] : memref<32x8xf32, #tpu.memory_space<vmem>>, vector<32x1xf32>
    %44 = vector.broadcast %43 : vector<32x1xf32> to vector<32x128xf32>
    %45 = arith.addf %42, %44 : vector<32x128xf32>
    %cst_27 = arith.constant 0.000000e+00 : f32
    %46 = vector.broadcast %cst_27 : f32 to vector<32x128xf32>
    %47 = arith.maximumf %45, %46 : vector<32x128xf32>
    %48 = arith.truncf %47 : vector<32x128xf32> to vector<32x128xbf16>
    %c224 = arith.constant 224 : index
    %c0_28 = arith.constant 0 : index
    %49 = vector.load %arg3[%c224, %c0_28] : memref<256x32xbf16, #tpu.memory_space<vmem>>, vector<8x32xbf16>
    %cst_29 = arith.constant dense<0.000000e+00> : vector<8x128xf32>
    %50 = tpu.matmul %49, %48, %cst_29 {dimension_numbers = #tpu.dot_dimension_numbers<[1], [0], [0], [1], [0, 0, 1, 1], [], []>} : vector<8x32xbf16>, vector<32x128xbf16>, vector<8x128xf32> -> vector<8x128xf32>
    %51 = vector.extract_strided_slice %50 {offsets = [0, 0], sizes = [1, 128], strides = [1, 1]} : vector<8x128xf32> to vector<1x128xf32>
    %c0_30 = arith.constant 0 : index
    %c6 = arith.constant 6 : index
    %52 = vector.load %arg4[%c0_30, %c6] : memref<32x8xf32, #tpu.memory_space<vmem>>, vector<1x1xf32>
    %53 = vector.broadcast %52 : vector<1x1xf32> to vector<1x128xf32>
    %54 = arith.addf %51, %53 : vector<1x128xf32>
    %c0_31 = arith.constant 0 : index
    %c0_32 = arith.constant 0 : index
    %55 = vector.load %arg5[%c0_31, %c0_32] : memref<1x128xf32, #tpu.memory_space<vmem>>, vector<1x128xf32>
    tpu.vector_store %arg5[%c0_31, %c0_32], %54 {strides = array<i32>} : memref<1x128xf32, #tpu.memory_space<vmem>>, vector<1x128xf32>,
    return
  }
  func.func @transform_0(%arg0: i32) -> (i32, i32) {
    %c0_i32 = arith.constant 0 : i32
    %c0_i32_0 = arith.constant 0 : i32
    return %c0_i32, %arg0 : i32, i32
  }
  func.func @transform_1(%arg0: i32) -> (i32, i32) {
    %c0_i32 = arith.constant 0 : i32
    %c0_i32_0 = arith.constant 0 : i32
    return %c0_i32, %arg0 : i32, i32
  }
  func.func @transform_2(%arg0: i32) -> (i32, i32) {
    %c0_i32 = arith.constant 0 : i32
    %c0_i32_0 = arith.constant 0 : i32
    %c0_i32_1 = arith.constant 0 : i32
    return %c0_i32, %c0_i32_0 : i32, i32
  }
  func.func @transform_3(%arg0: i32) -> (i32, i32) {
    %c0_i32 = arith.constant 0 : i32
    %c0_i32_0 = arith.constant 0 : i32
    %c0_i32_1 = arith.constant 0 : i32
    return %c0_i32, %c0_i32_0 : i32, i32
  }
  func.func @transform_4(%arg0: i32) -> (i32, i32) {
    %c0_i32 = arith.constant 0 : i32
    %c0_i32_0 = arith.constant 0 : i32
    return %c0_i32, %arg0 : i32, i32
  }
}

</mosaic_0001>

<llo_original>
// kernel: tpu_custom_call.1
$region0: #{tpu_custom_call.1}
  #allocation0 [shape = 'u32[]', space=smem, size = 0x4, offset = 0x4, fixed_abs, tag = 'smem constant byte address 0x4 - core index']
  #allocation1 [shape = 'u32[144,128]{1,0:T(1,128)}', space=vmem, size = 0x12000, scoped, tag = 'internal scratch']
  %s0 = inlined_call_operand.vmem [shape: bf16[32,128], index: 0, kind: input, shape index: {}]
  %s1 = inlined_call_operand.vmem [shape: bf16[32,128], index: 1, kind: input, shape index: {}]
  %s2 = inlined_call_operand.vmem [shape: bf16[256,32], index: 2, kind: input, shape index: {}]
  %s3 = inlined_call_operand.vmem [shape: f32[32,8], index: 3, kind: input, shape index: {}]
  %s4 = inlined_call_operand.hbm [shape: f32[1,128], index: 4, kind: output, shape index: {}]
  %s5 = sld [smem:[#allocation0]]
  $region26: #{tpu_custom_call.1} parent=0
    _
  %s7 = ssub.s32 1, %s5
  %s8 = scalar_select 0, %s7, %s5
  $region1: #{tpu_custom_call.1} parent=0
    #allocation2 [shape = 'u8[512]{0}', space=vmem, size = 0x400, scoped, tag = 'output window, operand 0, single buffered']
    #allocation3 [shape = 's32[1]{0}', space=sflag, size = 0x4, scoped, tag = 'scoped memory for tpu_custom_call.1']
    %9 = vsyncpa [#allocation3], 0
    // Predicated region
    $region2: #{tpu_custom_call.1} parent=1 // pred_check
      _
    $region3: #{tpu_custom_call.1} parent=1 // pred_check_branch
      %11 = sbr.rel (0) target = $region5
    $region4: #{tpu_custom_call.1} parent=1 // pred_region
      _
    $region5: #{tpu_custom_call.1} parent=1 // pred_fallthru
      _
    // Predicated region
    $region6: #{tpu_custom_call.1} parent=1 // pred_check
      _
    $region7: #{tpu_custom_call.1} parent=1 // pred_check_branch
      %13 = sbr.rel (0) target = $region9
    $region8: #{tpu_custom_call.1} parent=1 // pred_region
      _
    $region9: #{tpu_custom_call.1} parent=1 // pred_fallthru
      _
    // Predicated region
    $region10: #{tpu_custom_call.1} parent=1 // pred_check
      _
    $region11: #{tpu_custom_call.1} parent=1 // pred_check_branch
      %15 = sbr.rel (0) target = $region13
    $region12: #{tpu_custom_call.1} parent=1 // pred_region
      _
    $region13: #{tpu_custom_call.1} parent=1 // pred_fallthru
      _
    // Predicated region
    $region14: #{tpu_custom_call.1} parent=1 // pred_check
      _
    $region15: #{tpu_custom_call.1} parent=1 // pred_check_branch
      %17 = sbr.rel (0) target = $region17
    $region16: #{tpu_custom_call.1} parent=1 // pred_region
      _
    $region17: #{tpu_custom_call.1} parent=1 // pred_fallthru
      _
    %v19 = vld [vmem:[%s0] sm:$0xf]
    %v20 = vld [vmem:[%s0 + $0x4] sm:$0xf]
    %v21 = vld [vmem:[%s0 + $0x8] sm:$0xf]
    %v22 = vld [vmem:[%s0 + $0xc] sm:$0xf]
    %v23 = vld [vmem:[%s1] sm:$0xf]
    %v24 = vld [vmem:[%s1 + $0x4] sm:$0xf]
    %v25 = vld [vmem:[%s1 + $0x8] sm:$0xf]
    %v26 = vld [vmem:[%s1 + $0xc] sm:$0xf]
    %v27 = vld [vmem:[%s2] sm:$0xf]
    %v28 = vld [vmem:[%s2 + $0x4] sm:$0xf]
    %v29 = vld [vmem:[%s2 + $0x8] sm:$0xf]
    %v30 = vld [vmem:[%s2 + $0xc] sm:$0xf]
    %v31 = vld [vmem:[%s3] sm:$0xff]
    %v32 = vld [vmem:[%s3 + $0x8] sm:$0xff]
    %v33 = vld [vmem:[%s3 + $0x10] sm:$0xff]
    %v34 = vld [vmem:[%s3 + $0x18] sm:$0xff]
    %36 = vset.pattern.permute.xlu0 0
    %37 = vperm.xlu0 %36, %v31
    %v38 = vpop.permute.xlu0 %37
    %41 = vset.pattern.permute.xlu0 0
    %42 = vperm.xlu0 %41, %v32
    %v43 = vpop.permute.xlu0 %42
    %46 = vset.pattern.permute.xlu0 0
    %47 = vperm.xlu0 %46, %v33
    %v48 = vpop.permute.xlu0 %47
    %51 = vset.pattern.permute.xlu0 0
    %52 = vperm.xlu0 %51, %v34
    %v53 = vpop.permute.xlu0 %52
    %v59 = vunpack.c.l.b16 %v27
    %v60 = vunpack.c.l.b16 %v28
    %v61 = vunpack.c.l.b16 %v29
    %v62 = vunpack.c.l.b16 %v30
    %v63 = vpack.c.b16 %v60, %v59
    %v64 = vpack.c.b16 %v62, %v61
    %v69 = vunpack.c.l.b16 %v19
    %v70 = vunpack.c.l.b16 %v20
    %v71 = vunpack.c.l.b16 %v21
    %v72 = vunpack.c.l.b16 %v22
    %v73 = vpack.c.b16 %v70, %v69
    %v74 = vpack.c.b16 %v72, %v71
    %vm77 = vcmask 261120
    %v79 = vsel %vm77, %v63, 0
    %v82 = vsel %vm77, %v64, 0
    %84 = vmatprep.subr.bf16.mxu0 0
    %85 = vmatpush1.bf16.msra.mxu0 %v73
    %86 = vmatprep.subr.bf16.mxu0 0
    %87 = vmatpush1.bf16.msra.mxu0 %v74
    %88 = vmatprep.subr.bf16.mxu0 0
    %89 = vmatpush1.bf16.msra.mxu0 0
    %90 = vmatprep.subr.bf16.mxu0 0
    %91 = vmatpush1.bf16.msra.mxu0 0
    %92 = vmatprep.subr.bf16.mxu0 0
    %93 = vmatpush1.bf16.msra.mxu0 0
    %94 = vmatprep.subr.bf16.mxu0 0
    %95 = vmatpush1.bf16.msra.mxu0 0
    %96 = vmatprep.subr.bf16.mxu0 0
    %97 = vmatpush1.bf16.msra.mxu0 0
    %98 = vmatprep.subr.bf16.mxu0 0
    %99 = vmatpush1.bf16.msra.mxu0 0
    %100 = vmatprep.subr.bf16.mxu0 0
    %101 = vmatpush1.bf16.msra.mxu0 0
    %102 = vmatprep.subr.bf16.mxu0 0
    %103 = vmatpush1.bf16.msra.mxu0 0
    %104 = vmatprep.subr.bf16.mxu0 0
    %105 = vmatpush1.bf16.msra.mxu0 0
    %106 = vmatprep.subr.bf16.mxu0 0
    %107 = vmatpush1.bf16.msra.mxu0 0
    %108 = vmatprep.subr.bf16.mxu0 0
    %109 = vmatpush1.bf16.msra.mxu0 0
    %110 = vmatprep.subr.bf16.mxu0 0
    %111 = vmatpush1.bf16.msra.mxu0 0
    %112 = vmatprep.subr.bf16.mxu0 0
    %113 = vmatpush1.bf16.msra.mxu0 0
    %114 = vmatprep.subr.bf16.mxu0 0
    %115 = vmatpush1.bf16.msra.mxu0 0
    %116 = vmatprep.mubr.bf16.mxu0 0
    %117 = vmatmul.mubr.bf16.gmra.mrb[0].mxu0 %v79
    %v118 = vpop.f32.mrb[0].mxu0
    %v119 = vadd.f32 %v38, %v118
    %v120 = vpop.f32.mrb[0].mxu0
    %v121 = vpop.f32.mrb[0].mxu0
    %v122 = vadd.f32 %v43, %v121
    %v123 = vpop.f32.mrb[0].mxu0
    %124 = vmatprep.mubr.bf16.mxu0 0
    %125 = vmatmul.mubr.bf16.gmra.mrb[0].mxu0 %v82
    %v126 = vpop.f32.mrb[0].mxu0
    %v127 = vadd.f32 %v48, %v126
    %v128 = vpop.f32.mrb[0].mxu0
    %v129 = vpop.f32.mrb[0].mxu0
    %v130 = vadd.f32 %v53, %v129
    %v131 = vpop.f32.mrb[0].mxu0
    %132 = vdwg.mxu0
    %v133 = vmax.f32 %v119, 0.0
    %v134 = vmax.f32 %v122, 0.0
    %v135 = vmax.f32 %v127, 0.0
    %v136 = vmax.f32 %v130, 0.0
    %v137 = vpack.c.bf16 %v134, %v133
    %v138 = vpack.c.bf16 %v136, %v135
    %v139 = vld [vmem:[%s2 + $0x10] sm:$0xf]
    %v140 = vld [vmem:[%s2 + $0x14] sm:$0xf]
    %v141 = vld [vmem:[%s2 + $0x18] sm:$0xf]
    %v142 = vld [vmem:[%s2 + $0x1c] sm:$0xf]
    %143 = vset.pattern.permute.xlu0 1
    %144 = vperm.xlu0 %143, %v31
    %v145 = vpop.permute.xlu0 %144
    %147 = vset.pattern.permute.xlu0 1
    %148 = vperm.xlu0 %147, %v32
    %v149 = vpop.permute.xlu0 %148
    %151 = vset.pattern.permute.xlu0 1
    %152 = vperm.xlu0 %151, %v33
    %v153 = vpop.permute.xlu0 %152
    %155 = vset.pattern.permute.xlu0 1
    %156 = vperm.xlu0 %155, %v34
    %v157 = vpop.permute.xlu0 %156
    %v163 = vunpack.c.l.b16 %v139
    %v164 = vunpack.c.l.b16 %v140
    %v165 = vunpack.c.l.b16 %v141
    %v166 = vunpack.c.l.b16 %v142
    %v167 = vpack.c.b16 %v164, %v163
    %v168 = vpack.c.b16 %v166, %v165
    %v173 = vunpack.c.l.b16 %v23
    %v174 = vunpack.c.l.b16 %v24
    %v175 = vunpack.c.l.b16 %v25
    %v176 = vunpack.c.l.b16 %v26
    %v177 = vpack.c.b16 %v174, %v173
    %v178 = vpack.c.b16 %v176, %v175
    %v182 = vsel %vm77, %v167, 0
    %v185 = vsel %vm77, %v168, 0
    %187 = vmatprep.subr.bf16.mxu0 0
    %188 = vmatpush1.bf16.msra.mxu0 %v177
    %189 = vmatprep.subr.bf16.mxu0 0
    %190 = vmatpush1.bf16.msra.mxu0 %v178
    %191 = vmatprep.subr.bf16.mxu0 0
    %192 = vmatpush1.bf16.msra.mxu0 0
    %193 = vmatprep.subr.bf16.mxu0 0
    %194 = vmatpush1.bf16.msra.mxu0 0
    %195 = vmatprep.subr.bf16.mxu0 0
    %196 = vmatpush1.bf16.msra.mxu0 0
    %197 = vmatprep.subr.bf16.mxu0 0
    %198 = vmatpush1.bf16.msra.mxu0 0
    %199 = vmatprep.subr.bf16.mxu0 0
    %200 = vmatpush1.bf16.msra.mxu0 0
    %201 = vmatprep.subr.bf16.mxu0 0
    %202 = vmatpush1.bf16.msra.mxu0 0
    %203 = vmatprep.subr.bf16.mxu0 0
    %204 = vmatpush1.bf16.msra.mxu0 0
    %205 = vmatprep.subr.bf16.mxu0 0
    %206 = vmatpush1.bf16.msra.mxu0 0
    %207 = vmatprep.subr.bf16.mxu0 0
    %208 = vmatpush1.bf16.msra.mxu0 0
    %209 = vmatprep.subr.bf16.mxu0 0
    %210 = vmatpush1.bf16.msra.mxu0 0
    %211 = vmatprep.subr.bf16.mxu0 0
    %212 = vmatpush1.bf16.msra.mxu0 0
    %213 = vmatprep.subr.bf16.mxu0 0
    %214 = vmatpush1.bf16.msra.mxu0 0
    %215 = vmatprep.subr.bf16.mxu0 0
    %216 = vmatpush1.bf16.msra.mxu0 0
    %217 = vmatprep.subr.bf16.mxu0 0
    %218 = vmatpush1.bf16.msra.mxu0 0
    %219 = vmatprep.mubr.bf16.mxu0 0
    %220 = vmatmul.mubr.bf16.gmra.mrb[0].mxu0 %v182
    %v221 = vpop.f32.mrb[0].mxu0
    %v222 = vadd.f32 %v145, %v221
    %v223 = vpop.f32.mrb[0].mxu0
    %v224 = vpop.f32.mrb[0].mxu0
    %v225 = vadd.f32 %v149, %v224
    %v226 = vpop.f32.mrb[0].mxu0
    %227 = vmatprep.mubr.bf16.mxu0 0
    %228 = vmatmul.mubr.bf16.gmra.mrb[0].mxu0 %v185
    %v229 = vpop.f32.mrb[0].mxu0
    %v230 = vadd.f32 %v153, %v229
    %v231 = vpop.f32.mrb[0].mxu0
    %v232 = vpop.f32.mrb[0].mxu0
    %v233 = vadd.f32 %v157, %v232
    %v234 = vpop.f32.mrb[0].mxu0
    %235 = vdwg.mxu0
    %v236 = vmax.f32 %v222, 0.0
    %v237 = vmax.f32 %v225, 0.0
    %v238 = vmax.f32 %v230, 0.0
    %v239 = vmax.f32 %v233, 0.0
    %v240 = vpack.c.bf16 %v237, %v236
    %v241 = vpack.c.bf16 %v239, %v238
    %v242 = vld [vmem:[%s2 + $0x20] sm:$0xf]
    %v243 = vld [vmem:[%s2 + $0x24] sm:$0xf]
    %v244 = vld [vmem:[%s2 + $0x28] sm:$0xf]
    %v245 = vld [vmem:[%s2 + $0x2c] sm:$0xf]
    %246 = vset.pattern.permute.xlu0 2
    %247 = vperm.xlu0 %246, %v31
    %v248 = vpop.permute.xlu0 %247
    %250 = vset.pattern.permute.xlu0 2
    %251 = vperm.xlu0 %250, %v32
    %v252 = vpop.permute.xlu0 %251
    %254 = vset.pattern.permute.xlu0 2
    %255 = vperm.xlu0 %254, %v33
    %v256 = vpop.permute.xlu0 %255
    %258 = vset.pattern.permute.xlu0 2
    %259 = vperm.xlu0 %258, %v34
    %v260 = vpop.permute.xlu0 %259
    %v266 = vunpack.c.l.b16 %v242
    %v267 = vunpack.c.l.b16 %v243
    %v268 = vunpack.c.l.b16 %v244
    %v269 = vunpack.c.l.b16 %v245
    %v270 = vpack.c.b16 %v267, %v266
    %v271 = vpack.c.b16 %v269, %v268
    %v273 = vsel %vm77, %v270, 0
    %v276 = vsel %vm77, %v271, 0
    %278 = vmatprep.subr.bf16.mxu0 0
    %279 = vmatpush1.bf16.msra.mxu0 %v137
    %280 = vmatprep.subr.bf16.mxu0 0
    %281 = vmatpush1.bf16.msra.mxu0 %v138
    %282 = vmatprep.subr.bf16.mxu0 0
    %283 = vmatpush1.bf16.msra.mxu0 0
    %284 = vmatprep.subr.bf16.mxu0 0
    %285 = vmatpush1.bf16.msra.mxu0 0
    %286 = vmatprep.subr.bf16.mxu0 0
    %287 = vmatpush1.bf16.msra.mxu0 0
    %288 = vmatprep.subr.bf16.mxu0 0
    %289 = vmatpush1.bf16.msra.mxu0 0
    %290 = vmatprep.subr.bf16.mxu0 0
    %291 = vmatpush1.bf16.msra.mxu0 0
    %292 = vmatprep.subr.bf16.mxu0 0
    %293 = vmatpush1.bf16.msra.mxu0 0
    %294 = vmatprep.subr.bf16.mxu0 0
    %295 = vmatpush1.bf16.msra.mxu0 0
    %296 = vmatprep.subr.bf16.mxu0 0
    %297 = vmatpush1.bf16.msra.mxu0 0
    %298 = vmatprep.subr.bf16.mxu0 0
    %299 = vmatpush1.bf16.msra.mxu0 0
    %300 = vmatprep.subr.bf16.mxu0 0
    %301 = vmatpush1.bf16.msra.mxu0 0
    %302 = vmatprep.subr.bf16.mxu0 0
    %303 = vmatpush1.bf16.msra.mxu0 0
    %304 = vmatprep.subr.bf16.mxu0 0
    %305 = vmatpush1.bf16.msra.mxu0 0
    %306 = vmatprep.subr.bf16.mxu0 0
    %307 = vmatpush1.bf16.msra.mxu0 0
    %308 = vmatprep.subr.bf16.mxu0 0
    %309 = vmatpush1.bf16.msra.mxu0 0
    %310 = vmatprep.mubr.bf16.mxu0 0
    %311 = vmatmul.mubr.bf16.gmra.mrb[0].mxu0 %v273
    %v312 = vpop.f32.mrb[0].mxu0
    %v313 = vadd.f32 %v248, %v312
    %v314 = vpop.f32.mrb[0].mxu0
    %v315 = vpop.f32.mrb[0].mxu0
    %v316 = vadd.f32 %v252, %v315
    %v317 = vpop.f32.mrb[0].mxu0
    %318 = vmatprep.mubr.bf16.mxu0 0
    %319 = vmatmul.mubr.bf16.gmra.mrb[0].mxu0 %v276
    %v320 = vpop.f32.mrb[0].mxu0
    %v321 = vadd.f32 %v256, %v320
    %v322 = vpop.f32.mrb[0].mxu0
    %v323 = vpop.f32.mrb[0].mxu0
    %v324 = vadd.f32 %v260, %v323
    %v325 = vpop.f32.mrb[0].mxu0
    %326 = vdwg.mxu0
    %v327 = vpack.c.bf16 %v316, %v313
    %v328 = vpack.c.bf16 %v324, %v321
    %v329 = vld [vmem:[%s2 + $0x30] sm:$0xf]
    %v330 = vld [vmem:[%s2 + $0x34] sm:$0xf]
    %v331 = vld [vmem:[%s2 + $0x38] sm:$0xf]
    %v332 = vld [vmem:[%s2 + $0x3c] sm:$0xf]
    %333 = vset.pattern.permute.xlu0 3
    %334 = vperm.xlu0 %333, %v31
    %v335 = vpop.permute.xlu0 %334
    %337 = vset.pattern.permute.xlu0 3
    %338 = vperm.xlu0 %337, %v32
    %v339 = vpop.permute.xlu0 %338
    %341 = vset.pattern.permute.xlu0 3
    %342 = vperm.xlu0 %341, %v33
    %v343 = vpop.permute.xlu0 %342
    %345 = vset.pattern.permute.xlu0 3
    %346 = vperm.xlu0 %345, %v34
    %v347 = vpop.permute.xlu0 %346
    %v353 = vunpack.c.l.b16 %v329
    %v354 = vunpack.c.l.b16 %v330
    %v355 = vunpack.c.l.b16 %v331
    %v356 = vunpack.c.l.b16 %v332
    %v357 = vpack.c.b16 %v354, %v353
    %v358 = vpack.c.b16 %v356, %v355
    %v360 = vsel %vm77, %v357, 0
    %v363 = vsel %vm77, %v358, 0
    %365 = vmatprep.subr.bf16.mxu0 0
    %366 = vmatpush1.bf16.msra.mxu0 %v240
    %367 = vmatprep.subr.bf16.mxu0 0
    %368 = vmatpush1.bf16.msra.mxu0 %v241
    %369 = vmatprep.subr.bf16.mxu0 0
    %370 = vmatpush1.bf16.msra.mxu0 0
    %371 = vmatprep.subr.bf16.mxu0 0
    %372 = vmatpush1.bf16.msra.mxu0 0
    %373 = vmatprep.subr.bf16.mxu0 0
    %374 = vmatpush1.bf16.msra.mxu0 0
    %375 = vmatprep.subr.bf16.mxu0 0
    %376 = vmatpush1.bf16.msra.mxu0 0
    %377 = vmatprep.subr.bf16.mxu0 0
    %378 = vmatpush1.bf16.msra.mxu0 0
    %379 = vmatprep.subr.bf16.mxu0 0
    %380 = vmatpush1.bf16.msra.mxu0 0
    %381 = vmatprep.subr.bf16.mxu0 0
    %382 = vmatpush1.bf16.msra.mxu0 0
    %383 = vmatprep.subr.bf16.mxu0 0
    %384 = vmatpush1.bf16.msra.mxu0 0
    %385 = vmatprep.subr.bf16.mxu0 0
    %386 = vmatpush1.bf16.msra.mxu0 0
    %387 = vmatprep.subr.bf16.mxu0 0
    %388 = vmatpush1.bf16.msra.mxu0 0
    %389 = vmatprep.subr.bf16.mxu0 0
    %390 = vmatpush1.bf16.msra.mxu0 0
    %391 = vmatprep.subr.bf16.mxu0 0
    %392 = vmatpush1.bf16.msra.mxu0 0
    %393 = vmatprep.subr.bf16.mxu0 0
    %394 = vmatpush1.bf16.msra.mxu0 0
    %395 = vmatprep.subr.bf16.mxu0 0
    %396 = vmatpush1.bf16.msra.mxu0 0
    %397 = vmatprep.mubr.bf16.mxu0 0
    %398 = vmatmul.mubr.bf16.gmra.mrb[0].mxu0 %v360
    %v399 = vpop.f32.mrb[0].mxu0
    %v400 = vadd.f32 %v335, %v399
    %v401 = vpop.f32.mrb[0].mxu0
    %v402 = vpop.f32.mrb[0].mxu0
    %v403 = vadd.f32 %v339, %v402
    %v404 = vpop.f32.mrb[0].mxu0
    %405 = vmatprep.mubr.bf16.mxu0 0
    %406 = vmatmul.mubr.bf16.gmra.mrb[0].mxu0 %v363
    %v407 = vpop.f32.mrb[0].mxu0
    %v408 = vadd.f32 %v343, %v407
    %v409 = vpop.f32.mrb[0].mxu0
    %v410 = vpop.f32.mrb[0].mxu0
    %v411 = vadd.f32 %v347, %v410
    %v412 = vpop.f32.mrb[0].mxu0
    %413 = vdwg.mxu0
    %v414 = vpack.c.bf16 %v403, %v400
    %v415 = vpack.c.bf16 %v411, %v408
    %v416 = vld [vmem:[%s2 + $0x40] sm:$0xf]
    %v417 = vld [vmem:[%s2 + $0x44] sm:$0xf]
    %v418 = vld [vmem:[%s2 + $0x48] sm:$0xf]
    %v419 = vld [vmem:[%s2 + $0x4c] sm:$0xf]
    %v420 = vld [vmem:[%s2 + $0x50] sm:$0xf]
    %v421 = vld [vmem:[%s2 + $0x54] sm:$0xf]
    %v422 = vld [vmem:[%s2 + $0x58] sm:$0xf]
    %v423 = vld [vmem:[%s2 + $0x5c] sm:$0xf]
    %v428 = vunpack.c.l.b16 %v420
    %v429 = vunpack.c.l.b16 %v421
    %v430 = vunpack.c.l.b16 %v422
    %v431 = vunpack.c.l.b16 %v423
    %v432 = vpack.c.b16 %v429, %v428
    %v433 = vpack.c.b16 %v431, %v430
    %v435 = vsel %vm77, %v432, 0
    %v438 = vsel %vm77, %v433, 0
    %440 = vmatprep.subr.bf16.mxu0 0
    %441 = vmatpush1.bf16.msra.mxu0 %v414
    %442 = vmatprep.subr.bf16.mxu0 0
    %443 = vmatpush1.bf16.msra.mxu0 %v415
    %444 = vmatprep.subr.bf16.mxu0 0
    %445 = vmatpush1.bf16.msra.mxu0 0
    %446 = vmatprep.subr.bf16.mxu0 0
    %447 = vmatpush1.bf16.msra.mxu0 0
    %448 = vmatprep.subr.bf16.mxu0 0
    %449 = vmatpush1.bf16.msra.mxu0 0
    %450 = vmatprep.subr.bf16.mxu0 0
    %451 = vmatpush1.bf16.msra.mxu0 0
    %452 = vmatprep.subr.bf16.mxu0 0
    %453 = vmatpush1.bf16.msra.mxu0 0
    %454 = vmatprep.subr.bf16.mxu0 0
    %455 = vmatpush1.bf16.msra.mxu0 0
    %456 = vmatprep.subr.bf16.mxu0 0
    %457 = vmatpush1.bf16.msra.mxu0 0
    %458 = vmatprep.subr.bf16.mxu0 0
    %459 = vmatpush1.bf16.msra.mxu0 0
    %460 = vmatprep.subr.bf16.mxu0 0
    %461 = vmatpush1.bf16.msra.mxu0 0
    %462 = vmatprep.subr.bf16.mxu0 0
    %463 = vmatpush1.bf16.msra.mxu0 0
    %464 = vmatprep.subr.bf16.mxu0 0
    %465 = vmatpush1.bf16.msra.mxu0 0
    %466 = vmatprep.subr.bf16.mxu0 0
    %467 = vmatpush1.bf16.msra.mxu0 0
    %468 = vmatprep.subr.bf16.mxu0 0
    %469 = vmatpush1.bf16.msra.mxu0 0
    %470 = vmatprep.subr.bf16.mxu0 0
    %471 = vmatpush1.bf16.msra.mxu0 0
    %472 = vmatprep.mubr.bf16.mxu0 0
    %473 = vmatmul.mubr.bf16.gmra.mrb[0].mxu0 %v435
    %v474 = vpop.f32.mrb[0].mxu0
    %v475 = vadd.f32 0.0, %v474
    %v476 = vpop.f32.mrb[0].mxu0
    %v477 = vpop.f32.mrb[0].mxu0
    %v478 = vadd.f32 0.0, %v477
    %v479 = vpop.f32.mrb[0].mxu0
    %480 = vmatprep.mubr.bf16.mxu0 0
    %481 = vmatmul.mubr.bf16.gmra.mrb[0].mxu0 %v438
    %v482 = vpop.f32.mrb[0].mxu0
    %v483 = vadd.f32 0.0, %v482
    %v484 = vpop.f32.mrb[0].mxu0
    %v485 = vpop.f32.mrb[0].mxu0
    %v486 = vadd.f32 0.0, %v485
    %v487 = vpop.f32.mrb[0].mxu0
    %488 = vdwg.mxu0
    %v493 = vunpack.c.l.b16 %v416
    %v494 = vunpack.c.l.b16 %v417
    %v495 = vunpack.c.l.b16 %v418
    %v496 = vunpack.c.l.b16 %v419
    %v497 = vpack.c.b16 %v494, %v493
    %v498 = vpack.c.b16 %v496, %v495
    %v500 = vsel %vm77, %v497, 0
    %v503 = vsel %vm77, %v498, 0
    %505 = vmatprep.subr.bf16.mxu0 0
    %506 = vmatpush1.bf16.msra.mxu0 %v327
    %507 = vmatprep.subr.bf16.mxu0 0
    %508 = vmatpush1.bf16.msra.mxu0 %v328
    %509 = vmatprep.subr.bf16.mxu0 0
    %510 = vmatpush1.bf16.msra.mxu0 0
    %511 = vmatprep.subr.bf16.mxu0 0
    %512 = vmatpush1.bf16.msra.mxu0 0
    %513 = vmatprep.subr.bf16.mxu0 0
    %514 = vmatpush1.bf16.msra.mxu0 0
    %515 = vmatprep.subr.bf16.mxu0 0
    %516 = vmatpush1.bf16.msra.mxu0 0
    %517 = vmatprep.subr.bf16.mxu0 0
    %518 = vmatpush1.bf16.msra.mxu0 0
    %519 = vmatprep.subr.bf16.mxu0 0
    %520 = vmatpush1.bf16.msra.mxu0 0
    %521 = vmatprep.subr.bf16.mxu0 0
    %522 = vmatpush1.bf16.msra.mxu0 0
    %523 = vmatprep.subr.bf16.mxu0 0
    %524 = vmatpush1.bf16.msra.mxu0 0
    %525 = vmatprep.subr.bf16.mxu0 0
    %526 = vmatpush1.bf16.msra.mxu0 0
    %527 = vmatprep.subr.bf16.mxu0 0
    %528 = vmatpush1.bf16.msra.mxu0 0
    %529 = vmatprep.subr.bf16.mxu0 0
    %530 = vmatpush1.bf16.msra.mxu0 0
    %531 = vmatprep.subr.bf16.mxu0 0
    %532 = vmatpush1.bf16.msra.mxu0 0
    %533 = vmatprep.subr.bf16.mxu0 0
    %534 = vmatpush1.bf16.msra.mxu0 0
    %535 = vmatprep.subr.bf16.mxu0 0
    %536 = vmatpush1.bf16.msra.mxu0 0
    %537 = vmatprep.mubr.bf16.mxu0 0
    %538 = vmatmul.mubr.bf16.gmra.mrb[0].mxu0 %v500
    %v539 = vpop.f32.mrb[0].mxu0
    %v540 = vadd.f32 %v475, %v539
    %v541 = vpop.f32.mrb[0].mxu0
    %v542 = vpop.f32.mrb[0].mxu0
    %v543 = vadd.f32 %v478, %v542
    %v544 = vpop.f32.mrb[0].mxu0
    %545 = vmatprep.mubr.bf16.mxu0 0
    %546 = vmatmul.mubr.bf16.gmra.mrb[0].mxu0 %v503
    %v547 = vpop.f32.mrb[0].mxu0
    %v548 = vadd.f32 %v483, %v547
    %v549 = vpop.f32.mrb[0].mxu0
    %v550 = vpop.f32.mrb[0].mxu0
    %v551 = vadd.f32 %v486, %v550
    %v552 = vpop.f32.mrb[0].mxu0
    %553 = vdwg.mxu0
    %554 = vset.pattern.permute.xlu0 4
    %555 = vperm.xlu0 %554, %v31
    %v556 = vpop.permute.xlu0 %555
    %558 = vset.pattern.permute.xlu0 4
    %559 = vperm.xlu0 %558, %v32
    %v560 = vpop.permute.xlu0 %559
    %562 = vset.pattern.permute.xlu0 4
    %563 = vperm.xlu0 %562, %v33
    %v564 = vpop.permute.xlu0 %563
    %566 = vset.pattern.permute.xlu0 4
    %567 = vperm.xlu0 %566, %v34
    %v568 = vpop.permute.xlu0 %567
    %v570 = vadd.f32 %v540, %v556
    %v571 = vadd.f32 %v543, %v560
    %v572 = vadd.f32 %v548, %v564
    %v573 = vadd.f32 %v551, %v568
    %v574 = vmax.f32 %v570, 0.0
    %v575 = vmax.f32 %v571, 0.0
    %v576 = vmax.f32 %v572, 0.0
    %v577 = vmax.f32 %v573, 0.0
    %v578 = vpack.c.bf16 %v575, %v574
    %v579 = vpack.c.bf16 %v577, %v576
    %v580 = vld [vmem:[%s2 + $0x60] sm:$0xf]
    %v581 = vld [vmem:[%s2 + $0x64] sm:$0xf]
    %v582 = vld [vmem:[%s2 + $0x68] sm:$0xf]
    %v583 = vld [vmem:[%s2 + $0x6c] sm:$0xf]
    %584 = vset.pattern.permute.xlu0 5
    %585 = vperm.xlu0 %584, %v31
    %v586 = vpop.permute.xlu0 %585
    %588 = vset.pattern.permute.xlu0 5
    %589 = vperm.xlu0 %588, %v32
    %v590 = vpop.permute.xlu0 %589
    %592 = vset.pattern.permute.xlu0 5
    %593 = vperm.xlu0 %592, %v33
    %v594 = vpop.permute.xlu0 %593
    %596 = vset.pattern.permute.xlu0 5
    %597 = vperm.xlu0 %596, %v34
    %v598 = vpop.permute.xlu0 %597
    %v604 = vunpack.c.l.b16 %v580
    %v605 = vunpack.c.l.b16 %v581
    %v606 = vunpack.c.l.b16 %v582
    %v607 = vunpack.c.l.b16 %v583
    %v608 = vpack.c.b16 %v605, %v604
    %v609 = vpack.c.b16 %v607, %v606
    %v611 = vsel %vm77, %v608, 0
    %v614 = vsel %vm77, %v609, 0
    %616 = vmatprep.subr.bf16.mxu0 0
    %617 = vmatpush1.bf16.msra.mxu0 %v578
    %618 = vmatprep.subr.bf16.mxu0 0
    %619 = vmatpush1.bf16.msra.mxu0 %v579
    %620 = vmatprep.subr.bf16.mxu0 0
    %621 = vmatpush1.bf16.msra.mxu0 0
    %622 = vmatprep.subr.bf16.mxu0 0
    %623 = vmatpush1.bf16.msra.mxu0 0
    %624 = vmatprep.subr.bf16.mxu0 0
    %625 = vmatpush1.bf16.msra.mxu0 0
    %626 = vmatprep.subr.bf16.mxu0 0
    %627 = vmatpush1.bf16.msra.mxu0 0
    %628 = vmatprep.subr.bf16.mxu0 0
    %629 = vmatpush1.bf16.msra.mxu0 0
    %630 = vmatprep.subr.bf16.mxu0 0
    %631 = vmatpush1.bf16.msra.mxu0 0
    %632 = vmatprep.subr.bf16.mxu0 0
    %633 = vmatpush1.bf16.msra.mxu0 0
    %634 = vmatprep.subr.bf16.mxu0 0
    %635 = vmatpush1.bf16.msra.mxu0 0
    %636 = vmatprep.subr.bf16.mxu0 0
    %637 = vmatpush1.bf16.msra.mxu0 0
    %638 = vmatprep.subr.bf16.mxu0 0
    %639 = vmatpush1.bf16.msra.mxu0 0
    %640 = vmatprep.subr.bf16.mxu0 0
    %641 = vmatpush1.bf16.msra.mxu0 0
    %642 = vmatprep.subr.bf16.mxu0 0
    %643 = vmatpush1.bf16.msra.mxu0 0
    %644 = vmatprep.subr.bf16.mxu0 0
    %645 = vmatpush1.bf16.msra.mxu0 0
    %646 = vmatprep.subr.bf16.mxu0 0
    %647 = vmatpush1.bf16.msra.mxu0 0
    %648 = vmatprep.mubr.bf16.mxu0 0
    %649 = vmatmul.mubr.bf16.gmra.mrb[0].mxu0 %v611
    %v650 = vpop.f32.mrb[0].mxu0
    %v651 = vadd.f32 %v586, %v650
    %v652 = vpop.f32.mrb[0].mxu0
    %v653 = vpop.f32.mrb[0].mxu0
    %v654 = vadd.f32 %v590, %v653
    %v655 = vpop.f32.mrb[0].mxu0
    %656 = vmatprep.mubr.bf16.mxu0 0
    %657 = vmatmul.mubr.bf16.gmra.mrb[0].mxu0 %v614
    %v658 = vpop.f32.mrb[0].mxu0
    %v659 = vadd.f32 %v594, %v658
    %v660 = vpop.f32.mrb[0].mxu0
    %v661 = vpop.f32.mrb[0].mxu0
    %v662 = vadd.f32 %v598, %v661
    %v663 = vpop.f32.mrb[0].mxu0
    %664 = vdwg.mxu0
    %v665 = vmax.f32 %v651, 0.0
    %v666 = vmax.f32 %v654, 0.0
    %v667 = vmax.f32 %v659, 0.0
    %v668 = vmax.f32 %v662, 0.0
    %v669 = vpack.c.bf16 %v666, %v665
    %v670 = vpack.c.bf16 %v668, %v667
    %v671 = vld [vmem:[%s2 + $0x70] sm:$0xf]
    %v673 = vsel %vm77, %v671, 0
    %675 = vmatprep.subr.bf16.mxu0 0
    %676 = vmatpush1.bf16.msra.mxu0 %v669
    %677 = vmatprep.subr.bf16.mxu0 0
    %678 = vmatpush1.bf16.msra.mxu0 %v670
    %679 = vmatprep.subr.bf16.mxu0 0
    %680 = vmatpush1.bf16.msra.mxu0 0
    %681 = vmatprep.subr.bf16.mxu0 0
    %682 = vmatpush1.bf16.msra.mxu0 0
    %683 = vmatprep.subr.bf16.mxu0 0
    %684 = vmatpush1.bf16.msra.mxu0 0
    %685 = vmatprep.subr.bf16.mxu0 0
    %686 = vmatpush1.bf16.msra.mxu0 0
    %687 = vmatprep.subr.bf16.mxu0 0
    %688 = vmatpush1.bf16.msra.mxu0 0
    %689 = vmatprep.subr.bf16.mxu0 0
    %690 = vmatpush1.bf16.msra.mxu0 0
    %691 = vmatprep.subr.bf16.mxu0 0
    %692 = vmatpush1.bf16.msra.mxu0 0
    %693 = vmatprep.subr.bf16.mxu0 0
    %694 = vmatpush1.bf16.msra.mxu0 0
    %695 = vmatprep.subr.bf16.mxu0 0
    %696 = vmatpush1.bf16.msra.mxu0 0
    %697 = vmatprep.subr.bf16.mxu0 0
    %698 = vmatpush1.bf16.msra.mxu0 0
    %699 = vmatprep.subr.bf16.mxu0 0
    %700 = vmatpush1.bf16.msra.mxu0 0
    %701 = vmatprep.subr.bf16.mxu0 0
    %702 = vmatpush1.bf16.msra.mxu0 0
    %703 = vmatprep.subr.bf16.mxu0 0
    %704 = vmatpush1.bf16.msra.mxu0 0
    %705 = vmatprep.subr.bf16.mxu0 0
    %706 = vmatpush1.bf16.msra.mxu0 0
    %707 = vmatprep.mubr.bf16.mxu0 0
    %708 = vmatmul.mubr.bf16.gmra.mrb[0].mxu0 %v673
    %v709 = vpop.f32.mrb[0].mxu0
    %v710 = vadd.f32 0.0, %v709
    %v711 = vpop.f32.mrb[0].mxu0
    %v712 = vpop.f32.mrb[0].mxu0
    %v713 = vpop.f32.mrb[0].mxu0
    %714 = vdwg.mxu0
    %v715 = vld [vmem:[%s3] sm:$0x1]
    %717 = vset.pattern.permute.xlu0 6
    %718 = vperm.xlu0 %717, %v715
    %v719 = vpop.permute.xlu0 %718
    %v721 = vadd.f32 %v710, %v719
    %722 = vst [vmem:[#allocation2] sm:$0x1] %v721
    // Predicated region
    $region18: #{tpu_custom_call.1} parent=1 // pred_check
      _
    $region19: #{tpu_custom_call.1} parent=1 // pred_check_branch
      %724 = sbr.rel (0) target = $region21
    $region20: #{tpu_custom_call.1} parent=1 // pred_region
      %s726 = ssub.s32 16, 16
      %727 = vsyncadd [#allocation3], %s726
      %s729 = sshll.u32 [#allocation2], 4
      %s730 = int_to_ptr.vmem [resolvable:$true] %s729
      %732 = dma.vmem_to_hbm [thread:$0]  %s730, 16, %s4, [#allocation3]
    $region21: #{tpu_custom_call.1} parent=1 // pred_fallthru
      _
    // Predicated region
    $region22: #{tpu_custom_call.1} parent=1 // pred_check
      _
    $region23: #{tpu_custom_call.1} parent=1 // pred_check_branch
      %734 = sbr.rel (0) target = $region25
    $region24: #{tpu_custom_call.1} parent=1 // pred_region
      %735 = dma.done [#allocation3], 16
    $region25: #{tpu_custom_call.1} parent=1 // pred_fallthru
      _
    %736 = vsyncpa [#allocation3], 1

</llo_original>
